<compile_context>
chip_gen: v5e
topology: v5e:2x2
jax: 0.10.0
libtpu: 0.0.40
codegen_flags: <defaults>
</compile_context>

<pallas_src>
import jax
import jax.numpy as jnp
import numpy as np
from jax.experimental import pallas as pl
from jax.experimental.pallas import tpu as pltpu

HIGHEST = jax.lax.Precision.HIGHEST


def pinn_kernel(x_ref, p_ref, o_ref):
    # x_ref: (1, TM)  lane-dense batch tile (batch along the 128-lane axis)
    # p_ref: (20, 25) packed [w2 | w1 | b1 | b2 | w3^T | b3]
    # o_ref: (1, TM)  lane-dense output tile
    x = x_ref[...]                       # (1, TM)
    p = p_ref[...]                       # (20, 25)

    w2  = p[:, 0:20]                     # (20, 20)  PyTorch (out, in) layout
    w1c = p[:, 20:21]                    # (20, 1)
    b1c = p[:, 21:22]                    # (20, 1)
    b2c = p[:, 22:23]                    # (20, 1)
    w3c = p[:, 23:24]                    # (20, 1)
    b3  = p[0:1, 24:25]                  # (1, 1)

    # Layer 1: Linear(1, 20) + Tanh -- VPU broadcast FMA + EUP tanh.
    h1 = jnp.tanh(w1c * x + b1c)         # (20, TM)

    # Layer 2: Linear(20, 20) + Tanh -- single MXU matmul, batch in the lanes.
    h2 = jnp.tanh(
        jnp.dot(w2, h1, preferred_element_type=jnp.float32, precision=HIGHEST)
        + b2c
    )                                    # (20, TM)

    # Layer 3: Linear(20, 1) -- elementwise mul + sublane reduce (XLU, no MXU).
    y = jnp.sum(w3c * h2, axis=0, keepdims=True) + b3   # (1, TM)

    o_ref[...] = y.astype(o_ref.dtype)


def pinn_forward(x, params, *, tm=None):
    """Run the PINN MLP forward pass with a Pallas TPU kernel.

    x: (N, 1) float32, any N.
    params: PyTorch-layout dict:
        w1 (20,1), b1 (20,), w2 (20,20), b2 (20,), w3 (1,20), b3 (1,).
    """
    n, d = x.shape
    assert d == 1

    # (N, 1) -> (1, N) is a contiguous, copy-free relayout (batch -> lanes).
    x_row = x.astype(jnp.float32).reshape(1, n)

    # Tiny-batch fallback: need at least one full 128-lane tile.
    n_eff = n
    if n < 128:
        n_eff = 128
        x_row = jnp.pad(x_row, ((0, 0), (0, n_eff - n)))

    if tm is None:
        # Cover the batch with at most two lane-dense tiles (one per TC on
        # dual-core v7x); cap at 8192 lanes so huge batches keep a modest
        # VMEM footprint (~1.5 MB of activations per step).
        tm = min(pl.cdiv(n_eff, 2 * 128) * 128, 8192)
    assert tm % 128 == 0
    g = pl.cdiv(n_eff, tm)   # tail tile handled by Pallas boundary clipping

    # Fold ALL parameters into one resident (20, 25) block.
    w1 = params["w1"].astype(jnp.float32)                 # (20, 1)
    b1 = params["b1"].reshape(20, 1).astype(jnp.float32)  # (20, 1)
    w2 = params["w2"].astype(jnp.float32)                 # (20, 20)
    b2 = params["b2"].reshape(20, 1).astype(jnp.float32)  # (20, 1)
    w3t = params["w3"].astype(jnp.float32).T              # (20, 1)
    b3 = jnp.broadcast_to(
        params["b3"].reshape(1, 1).astype(jnp.float32), (20, 1)
    )
    packed = jnp.concatenate([w2, w1, b1, b2, w3t, b3], axis=1)   # (20, 25)

    # Advisory cost so XLA can overlap this tiny call with neighbors.
    cost = pl.CostEstimate(
        flops=880 * n,            # 40N (L1) + 800N (L2) + 40N (L3)
        transcendentals=40 * n,   # 2 x 20N tanh
        bytes_accessed=8 * n,     # 4N in + 4N out (params negligible)
    )

    out_row = pl.pallas_call(
        pinn_kernel,
        out_shape=jax.ShapeDtypeStruct((1, n_eff), jnp.float32),
        grid=(g,),
        in_specs=[
            pl.BlockSpec((1, tm), lambda i: (0, i)),     # x tile (lane-dense)
            pl.BlockSpec((20, 25), lambda i: (0, 0)),    # resident params
        ],
        out_specs=pl.BlockSpec((1, tm), lambda i: (0, i)),
        compiler_params=pltpu.CompilerParams(
            dimension_semantics=("parallel",),
        ),
        cost_estimate=cost,
    )(x_row, packed)

    if n_eff != n:
        out_row = out_row[:, :n]
    return out_row.reshape(n, 1)


def init_params(key):
    """Deterministic init matching nn.Linear's default U(-1/sqrt(fan_in), +).

    Shapes follow PyTorch exactly (weight is (out, in))."""
    ks = jax.random.split(key, 6)

    def linear(kw, kb, fan_in, fan_out):
        bound = 1.0 / np.sqrt(fan_in)
        w = jax.random.uniform(kw, (fan_out, fan_in), jnp.float32, -bound, bound)
        b = jax.random.uniform(kb, (fan_out,), jnp.float32, -bound, bound)
        return w, b

    w1, b1 = linear(ks[0], ks[1], 1, 20)
    w2, b2 = linear(ks[2], ks[3], 20, 20)
    w3, b3 = linear(ks[4], ks[5], 20, 1)
    return {"w1": w1, "b1": b1, "w2": w2, "b2": b2, "w3": w3, "b3": b3}


def pinn_forward_ref(x, p):
    """Pure-JAX reference identical to the PyTorch module (true-f32 dots)."""
    h1 = jnp.tanh(jnp.dot(x, p["w1"].T, precision=HIGHEST) + p["b1"])
    h2 = jnp.tanh(jnp.dot(h1, p["w2"].T, precision=HIGHEST) + p["b2"])
    return jnp.dot(h2, p["w3"].T, precision=HIGHEST) + p["b3"]


if __name__ == "__main__":
    key = jax.random.PRNGKey(0)
    k_param, k_x = jax.random.split(key)

    params = init_params(k_param)
    # Collocation points, shape (N, 1); N = 1000 is NOT a multiple of 128, so
    # the unpadded tail-tile path is exercised, and the auto-chosen tm=512
    # gives g=2 (one tile per TensorCore on v7x, two cheap steps elsewhere).
    x = jax.random.uniform(k_x, (1000, 1), jnp.float32, -1.0, 1.0)

    out = jax.block_until_ready(pinn_forward(x, params))
    ref = jax.block_until_ready(pinn_forward_ref(x, params))

    np.testing.assert_allclose(np.asarray(out), np.asarray(ref), rtol=1e-4, atol=1e-5)

    print("KERNEL_OK")
</pallas_src>

<mosaic_0001>
module attributes {stable_mosaic.version = 11 : i64} {
  func.func @pinn_kernel(%arg0: i32, %arg1: memref<1x512xf32, #tpu.memory_space<vmem>>, %arg2: memref<20x25xf32, #tpu.memory_space<vmem>>, %arg3: memref<1x512xf32, #tpu.memory_space<vmem>>) attributes {dimension_semantics = [#tpu.dimension_semantics<parallel>], iteration_bounds = array<i64: 2>, scalar_prefetch = 0 : i64, scratch_operands = 0 : i64, tpu.core_type = #tpu.core_type<tc>, window_params = [{transform_indices = @transform_0, window_bounds = array<i64: 1, 512>}, {pipeline_mode = #tpu.pipeline_mode<synchronous>, transform_indices = @transform_1, window_bounds = array<i64: 20, 25>}, {transform_indices = @transform_2, window_bounds = array<i64: 1, 512>}]} {
    %c0 = arith.constant 0 : index
    %c0_0 = arith.constant 0 : index
    %0 = vector.load %arg1[%c0, %c0_0] : memref<1x512xf32, #tpu.memory_space<vmem>>, vector<1x512xf32>
    %c0_1 = arith.constant 0 : index
    %c0_2 = arith.constant 0 : index
    %1 = vector.load %arg2[%c0_1, %c0_2] : memref<20x25xf32, #tpu.memory_space<vmem>>, vector<20x25xf32>
    %2 = vector.extract_strided_slice %1 {offsets = [0, 0], sizes = [20, 20], strides = [1, 1]} : vector<20x25xf32> to vector<20x20xf32>
    %3 = vector.extract_strided_slice %1 {offsets = [0, 20], sizes = [20, 1], strides = [1, 1]} : vector<20x25xf32> to vector<20x1xf32>
    %4 = vector.extract_strided_slice %1 {offsets = [0, 21], sizes = [20, 1], strides = [1, 1]} : vector<20x25xf32> to vector<20x1xf32>
    %5 = vector.extract_strided_slice %1 {offsets = [0, 22], sizes = [20, 1], strides = [1, 1]} : vector<20x25xf32> to vector<20x1xf32>
    %6 = vector.extract_strided_slice %1 {offsets = [0, 23], sizes = [20, 1], strides = [1, 1]} : vector<20x25xf32> to vector<20x1xf32>
    %7 = vector.extract_strided_slice %1 {offsets = [0, 24], sizes = [1, 1], strides = [1, 1]} : vector<20x25xf32> to vector<1x1xf32>
    %8 = vector.broadcast %3 : vector<20x1xf32> to vector<20x512xf32>
    %9 = vector.broadcast %0 : vector<1x512xf32> to vector<20x512xf32>
    %10 = arith.mulf %8, %9 : vector<20x512xf32>
    %11 = vector.broadcast %4 : vector<20x1xf32> to vector<20x512xf32>
    %12 = arith.addf %10, %11 : vector<20x512xf32>
    %13 = math.tanh %12 : vector<20x512xf32>
    %cst = arith.constant dense<0.000000e+00> : vector<20x512xf32>
    %14 = tpu.matmul %2, %13, %cst {dimension_numbers = #tpu.dot_dimension_numbers<[1], [0], [0], [1], [0, 0, 1, 1], [], []>, precision = #tpu.contract_precision<fp32>} : vector<20x20xf32>, vector<20x512xf32>, vector<20x512xf32> -> vector<20x512xf32>
    %15 = vector.broadcast %5 : vector<20x1xf32> to vector<20x512xf32>
    %16 = arith.addf %14, %15 : vector<20x512xf32>
    %17 = math.tanh %16 : vector<20x512xf32>
    %18 = vector.broadcast %6 : vector<20x1xf32> to vector<20x512xf32>
    %19 = arith.mulf %18, %17 : vector<20x512xf32>
    %cst_3 = arith.constant dense<0.000000e+00> : vector<512xf32>
    %20 = vector.multi_reduction <add>, %19, %cst_3 [0] : vector<20x512xf32> to vector<512xf32>
    %21 = vector.shape_cast %20 : vector<512xf32> to vector<1x512xf32>
    %22 = vector.broadcast %7 : vector<1x1xf32> to vector<1x512xf32>
    %23 = arith.addf %21, %22 : vector<1x512xf32>
    %c0_4 = arith.constant 0 : index
    %c0_5 = arith.constant 0 : index
    %24 = vector.load %arg3[%c0_4, %c0_5] : memref<1x512xf32, #tpu.memory_space<vmem>>, vector<1x512xf32>
    tpu.vector_store %arg3[%c0_4, %c0_5], %23 {strides = array<i32>} : memref<1x512xf32, #tpu.memory_space<vmem>>, vector<1x512xf32>,
    return
  }
  func.func @transform_0(%arg0: i32) -> (i32, i32) {
    %c0_i32 = arith.constant 0 : i32
    %c0_i32_0 = arith.constant 0 : i32
    return %c0_i32, %arg0 : i32, i32
  }
  func.func @transform_1(%arg0: i32) -> (i32, i32) {
    %c0_i32 = arith.constant 0 : i32
    %c0_i32_0 = arith.constant 0 : i32
    %c0_i32_1 = arith.constant 0 : i32
    return %c0_i32, %c0_i32_0 : i32, i32
  }
  func.func @transform_2(%arg0: i32) -> (i32, i32) {
    %c0_i32 = arith.constant 0 : i32
    %c0_i32_0 = arith.constant 0 : i32
    return %c0_i32, %arg0 : i32, i32
  }
}

</mosaic_0001>

<llo_original>
// kernel: tpu_custom_call.1
$region0: #{tpu_custom_call.1}
  #allocation0 [shape = 'u32[]', space=smem, size = 0x4, offset = 0x4, fixed_abs, tag = 'smem constant byte address 0x4 - core index']
  #allocation1 [shape = 'u32[72,128]{1,0:T(1,128)}', space=vmem, size = 0x9000, scoped, tag = 'internal scratch']
  %s0 = inlined_call_operand.hbm [shape: f32[1,1000], index: 0, kind: input, shape index: {}]
  %s1 = inlined_call_operand.hbm [shape: f32[20,25], index: 1, kind: input, shape index: {}]
  %s2 = inlined_call_operand.hbm [shape: f32[1,1000], index: 2, kind: output, shape index: {}]
  %s3 = sld [smem:[#allocation0]]
  $region49: #{tpu_custom_call.1} parent=0
    _
  %s5 = ssub.s32 1, %s3
  %s6 = scalar_select 0, %s5, %s3
  $region1: #{tpu_custom_call.1} parent=0
    #allocation2 [shape = 'u8[4096]{0}', space=vmem, size = 0x1000, scoped, tag = 'input window, operand 0']
    #allocation3 [shape = 's32[2]{0}', space=sflag, size = 0x8, scoped, tag = 'scoped memory for tpu_custom_call.1']
    #allocation4 [shape = 's32[2]{0}', space=sflag, size = 0x8, scoped, tag = 'scoped memory for tpu_custom_call.1']
    #allocation5 [shape = 'u8[12288]{0}', space=vmem, size = 0x3000, scoped, tag = 'input window, operand 1, single buffered']
    #allocation6 [shape = 's32[1]{0}', space=sflag, size = 0x4, scoped, tag = 'scoped memory for tpu_custom_call.1']
    #allocation7 [shape = 'u8[4096]{0}', space=vmem, size = 0x1000, scoped, tag = 'output window, operand 0']
    %7 = vsyncpa [#allocation3], 0
    %s8 = scalar_lea.sflag [#allocation3], 1
    %9 = vsyncpa %s8, 0
    %10 = vsyncpa [#allocation6], 0
    %11 = vsyncpa [#allocation4], 0
    %s12 = scalar_lea.sflag [#allocation4], 1
    %13 = vsyncpa %s12, 0
    loop: start=0, step=1, limit=4
    $region2: #{tpu_custom_call.1} parent=1 // loop_pre_header
      _
    $region3: #{tpu_custom_call.1} parent=1 // loop_header
      %s15 = sphi 0, %s19
      %p16 = scmp.ge.s32.totalorder %s15, 4
      %s25 = sphi 0, %s27
      %s28 = sphi 0, %s25
      %s29 = sphi 0, %s28
      %s45 = sphi 0, %s29
      %s49 = sphi 0, %s49
      %s51 = sphi 0, %s49
      %s52 = sphi 0, %s51
      %s66 = sphi 0, %s52
      %s72 = sphi 0, %s74
      %s75 = sphi 0, %s72
      %s76 = sphi 0, %s75
      %s92 = sphi 0, %s76
    $region4: #{tpu_custom_call.1} parent=1 // loop_header_branch
      %18 = sbr.rel (%p16) target = $region8
    $region5: #{tpu_custom_call.1} parent=1 // loop_body
      %s20 = ssub.s32 %s15, 1
      %s21 = ssub.s32 %s15, 2
      %s22 = sadd.s32 %s15, 1
      %s23 = ssub.s32 %s15, %s22
      %p24 = scmp.eq.s32.totalorder %s23, 0
      %s26 = sadd.s32 %s25, 1
      %s27 = scalar_select %p24, %s25, %s26
      %p30 = pneg %p24
      %p31 = scmp.eq.s32.totalorder %s15, 1
      %p32 = por %p30, %p31
      %p33 = scmp.ne.s32.totalorder %s25, %s28
      %p34 = scmp.eq.s32.totalorder %s15, 0
      %p35 = por %p33, %p34
      %p36 = scmp.ne.s32.totalorder %s25, %s28
      %p37 = scmp.eq.s32.totalorder %s20, 1
      %p38 = por %p36, %p37
      %p39 = scmp.ne.s32.totalorder %s28, %s29
      %p40 = scmp.eq.s32.totalorder %s20, 0
      %p41 = por %p39, %p40
      %p42 = scmp.ne.s32.totalorder %s28, %s29
      %p43 = scmp.eq.s32.totalorder %s21, 1
      %p44 = por %p42, %p43
      %p46 = scmp.ne.s32.totalorder %s29, %s45
      %p47 = scmp.eq.s32.totalorder %s21, 0
      %p48 = por %p46, %p47
      %s50 = sadd.s32 %s49, 1
      %p53 = scmp.eq.s32.totalorder %s15, 1
      %p54 = scmp.ne.s32.totalorder %s49, %s51
      %p55 = scmp.eq.s32.totalorder %s15, 0
      %p56 = por %p54, %p55
      %p57 = scmp.ne.s32.totalorder %s49, %s51
      %p58 = scmp.eq.s32.totalorder %s20, 1
      %p59 = por %p57, %p58
      %p60 = scmp.ne.s32.totalorder %s51, %s52
      %p61 = scmp.eq.s32.totalorder %s20, 0
      %p62 = por %p60, %p61
      %p63 = scmp.ne.s32.totalorder %s51, %s52
      %p64 = scmp.eq.s32.totalorder %s21, 1
      %p65 = por %p63, %p64
      %p67 = scmp.ne.s32.totalorder %s52, %s66
      %p68 = scmp.eq.s32.totalorder %s21, 0
      %p69 = por %p67, %p68
      %s70 = ssub.s32 %s15, %s22
      %p71 = scmp.eq.s32.totalorder %s70, 0
      %s73 = sadd.s32 %s72, 1
      %s74 = scalar_select %p71, %s72, %s73
      %p77 = pneg %p71
      %p78 = scmp.eq.s32.totalorder %s15, 1
      %p79 = por %p77, %p78
      %p80 = scmp.ne.s32.totalorder %s72, %s75
      %p81 = scmp.eq.s32.totalorder %s15, 0
      %p82 = por %p80, %p81
      %p83 = scmp.ne.s32.totalorder %s72, %s75
      %p84 = scmp.eq.s32.totalorder %s20, 1
      %p85 = por %p83, %p84
      %p86 = scmp.ne.s32.totalorder %s75, %s76
      %p87 = scmp.eq.s32.totalorder %s20, 0
      %p88 = por %p86, %p87
      %p89 = scmp.ne.s32.totalorder %s75, %s76
      %p90 = scmp.eq.s32.totalorder %s21, 1
      %p91 = por %p89, %p90
      %p93 = scmp.ne.s32.totalorder %s76, %s92
      %p94 = scmp.eq.s32.totalorder %s21, 0
      %p95 = por %p93, %p94
      %p96 = scmp.le.s32.totalorder 1, %s15
      %p97 = scmp.lt.s32.totalorder %s15, 3
      %p98 = pnand %p96, %p97
      %p99 = pneg %p98
      // Predicated region
      $region9: #{tpu_custom_call.1} parent=5 // pred_check
        _
      $region10: #{tpu_custom_call.1} parent=5 // pred_check_branch
        %101 = sbr.rel (%p98) target = $region12
      $region11: #{tpu_custom_call.1} parent=5 // pred_region
        %s102 = ssub.s32 %s15, 1
        // Predicated region
        $region13: #{tpu_custom_call.1} parent=11 // pred_check
          %p103 = pneg %p62
        $region14: #{tpu_custom_call.1} parent=11 // pred_check_branch
          %105 = sbr.rel (%p103) target = $region16
        $region15: #{tpu_custom_call.1} parent=11 // pred_region
          %107 = vsyncadd [#allocation6], 0
          %s108 = sshll.u32 %s1, 4
          %s109 = int_to_ptr.hbm [resolvable:$true] %s108
          %s110 = sshll.u32 [#allocation5], 4
          %s111 = int_to_ptr.vmem [resolvable:$true] %s110
          %116 = dma.hbm_to_vmem [thread:$0]  %s109, 384, %s111, [#allocation6], 128, 128, 8
        $region16: #{tpu_custom_call.1} parent=11 // pred_fallthru
          _
      $region12: #{tpu_custom_call.1} parent=5 // pred_fallthru
        _
      %p117 = scmp.lt.s32.totalorder %s15, 2
      // Predicated region
      $region17: #{tpu_custom_call.1} parent=5 // pred_check
        %p118 = pneg %p117
      $region18: #{tpu_custom_call.1} parent=5 // pred_check_branch
        %120 = sbr.rel (%p118) target = $region20
      $region19: #{tpu_custom_call.1} parent=5 // pred_region
        // Predicated region
        $region21: #{tpu_custom_call.1} parent=19 // pred_check
          %p121 = pneg %p35
        $region22: #{tpu_custom_call.1} parent=19 // pred_check_branch
          %123 = sbr.rel (%p121) target = $region24
        $region23: #{tpu_custom_call.1} parent=19 // pred_region
          %s124 = sand.u32 %s25, 1
          %s125 = scalar_lea.sflag [#allocation3], %s124
          %s126 = sand.u32 %s25, 1
          %s127 = smul.addr %s126, 4
          %s128 = scalar_lea.vmem [#allocation2], %s127
          %s129 = smul.u32 4, %s15
          %131 = vsyncadd %s125, 0
          %s132 = scalar_lea.hbm %s0, %s129
          %s134 = sshll.u32 %s132, 4
          %s135 = int_to_ptr.hbm [resolvable:$true] %s134
          %s136 = sshll.u32 %s128, 4
          %s137 = int_to_ptr.vmem [resolvable:$true] %s136
          %139 = dma.hbm_to_vmem [thread:$0]  %s135, 64, %s137, %s125
        $region24: #{tpu_custom_call.1} parent=19 // pred_fallthru
          _
      $region20: #{tpu_custom_call.1} parent=5 // pred_fallthru
        _
      %p140 = scmp.le.s32.totalorder 1, %s15
      %p141 = scmp.lt.s32.totalorder %s15, 3
      %p142 = pnand %p140, %p141
      %p143 = pneg %p142
      // Predicated region
      $region25: #{tpu_custom_call.1} parent=5 // pred_check
        _
      $region26: #{tpu_custom_call.1} parent=5 // pred_check_branch
        %145 = sbr.rel (%p142) target = $region28
      $region27: #{tpu_custom_call.1} parent=5 // pred_region
        %s146 = ssub.s32 %s15, 1
        %s147 = sand.u32 %s28, 1
        %s148 = scalar_lea.sflag [#allocation3], %s147
        %s149 = sand.u32 %s28, 1
        %s150 = smul.addr %s149, 4
        %s151 = scalar_lea.vmem [#allocation2], %s150
        // Predicated region
        $region29: #{tpu_custom_call.1} parent=27 // pred_check
          %p152 = pneg %p41
        $region30: #{tpu_custom_call.1} parent=27 // pred_check_branch
          %154 = sbr.rel (%p152) target = $region32
        $region31: #{tpu_custom_call.1} parent=27 // pred_region
          %156 = dma.done %s148, 64
        $region32: #{tpu_custom_call.1} parent=27 // pred_fallthru
          _
        // Predicated region
        $region33: #{tpu_custom_call.1} parent=27 // pred_check
          %p157 = pneg %p62
        $region34: #{tpu_custom_call.1} parent=27 // pred_check_branch
          %159 = sbr.rel (%p157) target = $region36
        $region35: #{tpu_custom_call.1} parent=27 // pred_region
          %161 = dma.done [#allocation6], 384
        $region36: #{tpu_custom_call.1} parent=27 // pred_fallthru
          _
        %s162 = sand.u32 %s28, 1
        %s163 = scalar_lea.sflag [#allocation3], %s162
        %s164 = sand.u32 %s28, 1
        %s165 = smul.addr %s164, 4
        %s166 = scalar_lea.vmem [#allocation2], %s165
        %p167 = pneg %p41
        %p168 = pneg %p38
        %p169 = pneg %p62
        %p170 = pneg %p59
        %p171 = pneg %p88
        %p172 = pneg %p85
        %s173 = sand.u32 %s75, 1
        %s174 = scalar_lea.sflag [#allocation4], %s173
        %s175 = sand.u32 %s75, 1
        %s176 = smul.addr %s175, 4
        %s177 = scalar_lea.vmem [#allocation7], %s176
        %s178 = smul.u32 4, %s20
        %s179 = smul.u32 4, %s20
        %v180 = vld [vmem:[%s151] sm:$0xf]
        %v181 = vld [vmem:[#allocation5] sm:$0xff]
        %v182 = vld [vmem:[#allocation5 + $0x8] sm:$0xff]
        %v183 = vld [vmem:[#allocation5 + $0x10] sm:$0xf]
        %185 = vset.pattern.permute.xlu0 20
        %186 = vperm.xlu0 %185, %v181
        %v187 = vpop.permute.xlu0 %186
        %190 = vset.pattern.permute.xlu0 20
        %191 = vperm.xlu0 %190, %v182
        %v192 = vpop.permute.xlu0 %191
        %195 = vset.pattern.permute.xlu0 20
        %196 = vperm.xlu0 %195, %v183
        %v197 = vpop.permute.xlu0 %196
        %v200 = vperm.slane %v180, 0
        %v201 = vperm.slane %v180, 1
        %v202 = vperm.slane %v180, 2
        %v203 = vperm.slane %v180, 3
        %v208 = vmul.f32 %v187, %v200
        %v209 = vmul.f32 %v187, %v201
        %v210 = vmul.f32 %v187, %v202
        %v211 = vmul.f32 %v187, %v203
        %v212 = vmul.f32 %v192, %v200
        %v213 = vmul.f32 %v192, %v201
        %v214 = vmul.f32 %v192, %v202
        %v215 = vmul.f32 %v192, %v203
        %v216 = vmul.f32 %v197, %v200
        %v217 = vmul.f32 %v197, %v201
        %v218 = vmul.f32 %v197, %v202
        %v219 = vmul.f32 %v197, %v203
        %220 = vset.pattern.permute.xlu0 21
        %221 = vperm.xlu0 %220, %v181
        %v222 = vpop.permute.xlu0 %221
        %224 = vset.pattern.permute.xlu0 21
        %225 = vperm.xlu0 %224, %v182
        %v226 = vpop.permute.xlu0 %225
        %228 = vset.pattern.permute.xlu0 21
        %229 = vperm.xlu0 %228, %v183
        %v230 = vpop.permute.xlu0 %229
        %v232 = vadd.f32 %v208, %v222
        %v233 = vadd.f32 %v209, %v222
        %v234 = vadd.f32 %v210, %v222
        %v235 = vadd.f32 %v211, %v222
        %v236 = vadd.f32 %v212, %v226
        %v237 = vadd.f32 %v213, %v226
        %v238 = vadd.f32 %v214, %v226
        %v239 = vadd.f32 %v215, %v226
        %v240 = vadd.f32 %v216, %v230
        %v241 = vadd.f32 %v217, %v230
        %v242 = vadd.f32 %v218, %v230
        %v243 = vadd.f32 %v219, %v230
        %v244 = vtanh.pop %v232
        %v245 = vtanh.pop %v233
        %v246 = vtanh.pop %v234
        %v247 = vtanh.pop %v235
        %v248 = vtanh.pop %v236
        %v249 = vtanh.pop %v237
        %v250 = vtanh.pop %v238
        %v251 = vtanh.pop %v239
        %v252 = vtanh.pop %v240
        %v253 = vtanh.pop %v241
        %v254 = vtanh.pop %v242
        %v255 = vtanh.pop %v243
        %256 = vset.pattern.permute.xlu0 22
        %257 = vperm.xlu0 %256, %v181
        %v258 = vpop.permute.xlu0 %257
        %260 = vset.pattern.permute.xlu0 22
        %261 = vperm.xlu0 %260, %v182
        %v262 = vpop.permute.xlu0 %261
        %264 = vset.pattern.permute.xlu0 22
        %265 = vperm.xlu0 %264, %v183
        %v266 = vpop.permute.xlu0 %265
        %vm268 = vcmask 162816
        %v269 = vsel %vm268, %v181, 0
        %v271 = vsel %vm268, %v182, 0
        %v273 = vsel %vm268, %v183, 0
        %vm275 = vcmask 1043456
        %v277 = vsel %vm275, %v252, 0
        %v280 = vsel %vm275, %v253, 0
        %v283 = vsel %vm275, %v254, 0
        %v286 = vsel %vm275, %v255, 0
        %288 = vmatpush.msra.mxu0 0.0
        %289 = vmatpush.msra.mxu0 0.0
        %290 = vmatpush.msra.mxu0 0.0
        %291 = vmatpush.msra.mxu0 0.0
        %292 = vmatpush.msra.mxu0 0.0
        %293 = vmatpush.msra.mxu0 0.0
        %294 = vmatpush.msra.mxu0 0.0
        %295 = vmatpush.msra.mxu0 0.0
        %296 = vmatpush.msra.mxu0 0.0
        %297 = vmatpush.msra.mxu0 0.0
        %298 = vmatpush.msra.mxu0 0.0
        %299 = vmatpush.msra.mxu0 0.0
        %300 = vmatpush.msra.mxu0 0.0
        %v301 = vand.u32 %v277, 4294901760
        %302 = vmatpush.msra.mxu0 %v301
        %v303 = vand.u32 %v248, 4294901760
        %304 = vmatpush.msra.mxu0 %v303
        %v305 = vand.u32 %v244, 4294901760
        %306 = vmatpush.msra.mxu0 %v305
        %v307 = vand.u32 %v269, 4294901760
        %v308 = vsub.f32 %v269, %v307
        %v309 = vand.u32 %v308, 4294901760
        %v310 = vsub.f32 %v308, %v309
        %v311 = vand.u32 %v310, 4294901760
        %312 = vmatmul.f32.gmra.mxu0 %v311
        %v313 = vpop.f32.mrf.mxu0
        %v314 = vadd.f32 %v258, %v313
        %v315 = vand.u32 %v271, 4294901760
        %v316 = vsub.f32 %v271, %v315
        %v317 = vand.u32 %v316, 4294901760
        %v318 = vsub.f32 %v316, %v317
        %v319 = vand.u32 %v318, 4294901760
        %320 = vmatmul.f32.gmra.mxu0 %v319
        %v321 = vpop.f32.mrf.mxu0
        %v322 = vadd.f32 %v262, %v321
        %v323 = vand.u32 %v273, 4294901760
        %v324 = vsub.f32 %v273, %v323
        %v325 = vand.u32 %v324, 4294901760
        %v326 = vsub.f32 %v324, %v325
        %v327 = vand.u32 %v326, 4294901760
        %328 = vmatmul.f32.gmra.mxu0 %v327
        %v329 = vpop.f32.mrf.mxu0
        %v330 = vadd.f32 %v266, %v329
        %331 = vdwg.mxu0
        %332 = vmatpush.msra.mxu0 0.0
        %333 = vmatpush.msra.mxu0 0.0
        %334 = vmatpush.msra.mxu0 0.0
        %335 = vmatpush.msra.mxu0 0.0
        %336 = vmatpush.msra.mxu0 0.0
        %337 = vmatpush.msra.mxu0 0.0
        %338 = vmatpush.msra.mxu0 0.0
        %339 = vmatpush.msra.mxu0 0.0
        %340 = vmatpush.msra.mxu0 0.0
        %341 = vmatpush.msra.mxu0 0.0
        %342 = vmatpush.msra.mxu0 0.0
        %343 = vmatpush.msra.mxu0 0.0
        %344 = vmatpush.msra.mxu0 0.0
        %v345 = vand.u32 %v277, 4294901760
        %v346 = vsub.f32 %v277, %v345
        %v347 = vand.u32 %v346, 4294901760
        %v348 = vsub.f32 %v346, %v347
        %v349 = vand.u32 %v348, 4294901760
        %350 = vmatpush.msra.mxu0 %v349
        %v351 = vand.u32 %v248, 4294901760
        %v352 = vsub.f32 %v248, %v351
        %v353 = vand.u32 %v352, 4294901760
        %v354 = vsub.f32 %v352, %v353
        %v355 = vand.u32 %v354, 4294901760
        %356 = vmatpush.msra.mxu0 %v355
        %v357 = vand.u32 %v244, 4294901760
        %v358 = vsub.f32 %v244, %v357
        %v359 = vand.u32 %v358, 4294901760
        %v360 = vsub.f32 %v358, %v359
        %v361 = vand.u32 %v360, 4294901760
        %362 = vmatpush.msra.mxu0 %v361
        %v363 = vand.u32 %v269, 4294901760
        %364 = vmatmul.f32.gmra.mxu0 %v363
        %v365 = vpop.f32.mrf.mxu0
        %v366 = vadd.f32 %v314, %v365
        %v367 = vand.u32 %v271, 4294901760
        %368 = vmatmul.f32.gmra.mxu0 %v367
        %v369 = vpop.f32.mrf.mxu0
        %v370 = vadd.f32 %v322, %v369
        %v371 = vand.u32 %v273, 4294901760
        %372 = vmatmul.f32.gmra.mxu0 %v371
        %v373 = vpop.f32.mrf.mxu0
        %v374 = vadd.f32 %v330, %v373
        %375 = vdwg.mxu0
        %376 = vmatpush.msra.mxu0 0.0
        %377 = vmatpush.msra.mxu0 0.0
        %378 = vmatpush.msra.mxu0 0.0
        %379 = vmatpush.msra.mxu0 0.0
        %380 = vmatpush.msra.mxu0 0.0
        %381 = vmatpush.msra.mxu0 0.0
        %382 = vmatpush.msra.mxu0 0.0
        %383 = vmatpush.msra.mxu0 0.0
        %384 = vmatpush.msra.mxu0 0.0
        %385 = vmatpush.msra.mxu0 0.0
        %386 = vmatpush.msra.mxu0 0.0
        %387 = vmatpush.msra.mxu0 0.0
        %388 = vmatpush.msra.mxu0 0.0
        %v389 = vand.u32 %v277, 4294901760
        %v390 = vsub.f32 %v277, %v389
        %391 = vmatpush.msra.mxu0 %v390
        %v392 = vand.u32 %v248, 4294901760
        %v393 = vsub.f32 %v248, %v392
        %394 = vmatpush.msra.mxu0 %v393
        %v395 = vand.u32 %v244, 4294901760
        %v396 = vsub.f32 %v244, %v395
        %397 = vmatpush.msra.mxu0 %v396
        %v398 = vand.u32 %v269, 4294901760
        %v399 = vsub.f32 %v269, %v398
        %400 = vmatmul.f32.gmra.mxu0 %v399
        %v401 = vpop.f32.mrf.mxu0
        %v402 = vadd.f32 %v366, %v401
        %v403 = vand.u32 %v271, 4294901760
        %v404 = vsub.f32 %v271, %v403
        %405 = vmatmul.f32.gmra.mxu0 %v404
        %v406 = vpop.f32.mrf.mxu0
        %v407 = vadd.f32 %v370, %v406
        %v408 = vand.u32 %v273, 4294901760
        %v409 = vsub.f32 %v273, %v408
        %410 = vmatmul.f32.gmra.mxu0 %v409
        %v411 = vpop.f32.mrf.mxu0
        %v412 = vadd.f32 %v374, %v411
        %413 = vdwg.mxu0
        %414 = vmatpush.msra.mxu0 0.0
        %415 = vmatpush.msra.mxu0 0.0
        %416 = vmatpush.msra.mxu0 0.0
        %417 = vmatpush.msra.mxu0 0.0
        %418 = vmatpush.msra.mxu0 0.0
        %419 = vmatpush.msra.mxu0 0.0
        %420 = vmatpush.msra.mxu0 0.0
        %421 = vmatpush.msra.mxu0 0.0
        %422 = vmatpush.msra.mxu0 0.0
        %423 = vmatpush.msra.mxu0 0.0
        %424 = vmatpush.msra.mxu0 0.0
        %425 = vmatpush.msra.mxu0 0.0
        %426 = vmatpush.msra.mxu0 0.0
        %v427 = vand.u32 %v277, 4294901760
        %428 = vmatpush.msra.mxu0 %v427
        %v429 = vand.u32 %v248, 4294901760
        %430 = vmatpush.msra.mxu0 %v429
        %v431 = vand.u32 %v244, 4294901760
        %432 = vmatpush.msra.mxu0 %v431
        %v433 = vand.u32 %v269, 4294901760
        %v434 = vsub.f32 %v269, %v433
        %v435 = vand.u32 %v434, 4294901760
        %436 = vmatmul.f32.gmra.mxu0 %v435
        %v437 = vpop.f32.mrf.mxu0
        %v438 = vadd.f32 %v402, %v437
        %v439 = vand.u32 %v271, 4294901760
        %v440 = vsub.f32 %v271, %v439
        %v441 = vand.u32 %v440, 4294901760
        %442 = vmatmul.f32.gmra.mxu0 %v441
        %v443 = vpop.f32.mrf.mxu0
        %v444 = vadd.f32 %v407, %v443
        %v445 = vand.u32 %v273, 4294901760
        %v446 = vsub.f32 %v273, %v445
        %v447 = vand.u32 %v446, 4294901760
        %448 = vmatmul.f32.gmra.mxu0 %v447
        %v449 = vpop.f32.mrf.mxu0
        %v450 = vadd.f32 %v412, %v449
        %451 = vdwg.mxu0
        %452 = vmatpush.msra.mxu0 0.0
        %453 = vmatpush.msra.mxu0 0.0
        %454 = vmatpush.msra.mxu0 0.0
        %455 = vmatpush.msra.mxu0 0.0
        %456 = vmatpush.msra.mxu0 0.0
        %457 = vmatpush.msra.mxu0 0.0
        %458 = vmatpush.msra.mxu0 0.0
        %459 = vmatpush.msra.mxu0 0.0
        %460 = vmatpush.msra.mxu0 0.0
        %461 = vmatpush.msra.mxu0 0.0
        %462 = vmatpush.msra.mxu0 0.0
        %463 = vmatpush.msra.mxu0 0.0
        %464 = vmatpush.msra.mxu0 0.0
        %v465 = vand.u32 %v277, 4294901760
        %v466 = vsub.f32 %v277, %v465
        %v467 = vand.u32 %v466, 4294901760
        %468 = vmatpush.msra.mxu0 %v467
        %v469 = vand.u32 %v248, 4294901760
        %v470 = vsub.f32 %v248, %v469
        %v471 = vand.u32 %v470, 4294901760
        %472 = vmatpush.msra.mxu0 %v471
        %v473 = vand.u32 %v244, 4294901760
        %v474 = vsub.f32 %v244, %v473
        %v475 = vand.u32 %v474, 4294901760
        %476 = vmatpush.msra.mxu0 %v475
        %v477 = vand.u32 %v269, 4294901760
        %478 = vmatmul.f32.gmra.mxu0 %v477
        %v479 = vpop.f32.mrf.mxu0
        %v480 = vadd.f32 %v438, %v479
        %v481 = vand.u32 %v271, 4294901760
        %482 = vmatmul.f32.gmra.mxu0 %v481
        %v483 = vpop.f32.mrf.mxu0
        %v484 = vadd.f32 %v444, %v483
        %v485 = vand.u32 %v273, 4294901760
        %486 = vmatmul.f32.gmra.mxu0 %v485
        %v487 = vpop.f32.mrf.mxu0
        %v488 = vadd.f32 %v450, %v487
        %489 = vdwg.mxu0
        %490 = vmatpush.msra.mxu0 0.0
        %491 = vmatpush.msra.mxu0 0.0
        %492 = vmatpush.msra.mxu0 0.0
        %493 = vmatpush.msra.mxu0 0.0
        %494 = vmatpush.msra.mxu0 0.0
        %495 = vmatpush.msra.mxu0 0.0
        %496 = vmatpush.msra.mxu0 0.0
        %497 = vmatpush.msra.mxu0 0.0
        %498 = vmatpush.msra.mxu0 0.0
        %499 = vmatpush.msra.mxu0 0.0
        %500 = vmatpush.msra.mxu0 0.0
        %501 = vmatpush.msra.mxu0 0.0
        %502 = vmatpush.msra.mxu0 0.0
        %v503 = vand.u32 %v277, 4294901760
        %504 = vmatpush.msra.mxu0 %v503
        %v505 = vand.u32 %v248, 4294901760
        %506 = vmatpush.msra.mxu0 %v505
        %v507 = vand.u32 %v244, 4294901760
        %508 = vmatpush.msra.mxu0 %v507
        %v509 = vand.u32 %v269, 4294901760
        %510 = vmatmul.f32.gmra.mxu0 %v509
        %v511 = vpop.f32.mrf.mxu0
        %v512 = vadd.f32 %v480, %v511
        %v513 = vand.u32 %v271, 4294901760
        %514 = vmatmul.f32.gmra.mxu0 %v513
        %v515 = vpop.f32.mrf.mxu0
        %v516 = vadd.f32 %v484, %v515
        %v517 = vand.u32 %v273, 4294901760
        %518 = vmatmul.f32.gmra.mxu0 %v517
        %v519 = vpop.f32.mrf.mxu0
        %v520 = vadd.f32 %v488, %v519
        %521 = vdwg.mxu0
        %522 = vmatpush.msra.mxu0 0.0
        %523 = vmatpush.msra.mxu0 0.0
        %524 = vmatpush.msra.mxu0 0.0
        %525 = vmatpush.msra.mxu0 0.0
        %526 = vmatpush.msra.mxu0 0.0
        %527 = vmatpush.msra.mxu0 0.0
        %528 = vmatpush.msra.mxu0 0.0
        %529 = vmatpush.msra.mxu0 0.0
        %530 = vmatpush.msra.mxu0 0.0
        %531 = vmatpush.msra.mxu0 0.0
        %532 = vmatpush.msra.mxu0 0.0
        %533 = vmatpush.msra.mxu0 0.0
        %534 = vmatpush.msra.mxu0 0.0
        %v535 = vand.u32 %v280, 4294901760
        %536 = vmatpush.msra.mxu0 %v535
        %v537 = vand.u32 %v249, 4294901760
        %538 = vmatpush.msra.mxu0 %v537
        %v539 = vand.u32 %v245, 4294901760
        %540 = vmatpush.msra.mxu0 %v539
        %v541 = vand.u32 %v269, 4294901760
        %v542 = vsub.f32 %v269, %v541
        %v543 = vand.u32 %v542, 4294901760
        %v544 = vsub.f32 %v542, %v543
        %v545 = vand.u32 %v544, 4294901760
        %546 = vmatmul.f32.gmra.mxu0 %v545
        %v547 = vpop.f32.mrf.mxu0
        %v548 = vadd.f32 %v258, %v547
        %v549 = vand.u32 %v271, 4294901760
        %v550 = vsub.f32 %v271, %v549
        %v551 = vand.u32 %v550, 4294901760
        %v552 = vsub.f32 %v550, %v551
        %v553 = vand.u32 %v552, 4294901760
        %554 = vmatmul.f32.gmra.mxu0 %v553
        %v555 = vpop.f32.mrf.mxu0
        %v556 = vadd.f32 %v262, %v555
        %v557 = vand.u32 %v273, 4294901760
        %v558 = vsub.f32 %v273, %v557
        %v559 = vand.u32 %v558, 4294901760
        %v560 = vsub.f32 %v558, %v559
        %v561 = vand.u32 %v560, 4294901760
        %562 = vmatmul.f32.gmra.mxu0 %v561
        %v563 = vpop.f32.mrf.mxu0
        %v564 = vadd.f32 %v266, %v563
        %565 = vdwg.mxu0
        %566 = vmatpush.msra.mxu0 0.0
        %567 = vmatpush.msra.mxu0 0.0
        %568 = vmatpush.msra.mxu0 0.0
        %569 = vmatpush.msra.mxu0 0.0
        %570 = vmatpush.msra.mxu0 0.0
        %571 = vmatpush.msra.mxu0 0.0
        %572 = vmatpush.msra.mxu0 0.0
        %573 = vmatpush.msra.mxu0 0.0
        %574 = vmatpush.msra.mxu0 0.0
        %575 = vmatpush.msra.mxu0 0.0
        %576 = vmatpush.msra.mxu0 0.0
        %577 = vmatpush.msra.mxu0 0.0
        %578 = vmatpush.msra.mxu0 0.0
        %v579 = vand.u32 %v280, 4294901760
        %v580 = vsub.f32 %v280, %v579
        %v581 = vand.u32 %v580, 4294901760
        %v582 = vsub.f32 %v580, %v581
        %v583 = vand.u32 %v582, 4294901760
        %584 = vmatpush.msra.mxu0 %v583
        %v585 = vand.u32 %v249, 4294901760
        %v586 = vsub.f32 %v249, %v585
        %v587 = vand.u32 %v586, 4294901760
        %v588 = vsub.f32 %v586, %v587
        %v589 = vand.u32 %v588, 4294901760
        %590 = vmatpush.msra.mxu0 %v589
        %v591 = vand.u32 %v245, 4294901760
        %v592 = vsub.f32 %v245, %v591
        %v593 = vand.u32 %v592, 4294901760
        %v594 = vsub.f32 %v592, %v593
        %v595 = vand.u32 %v594, 4294901760
        %596 = vmatpush.msra.mxu0 %v595
        %v597 = vand.u32 %v269, 4294901760
        %598 = vmatmul.f32.gmra.mxu0 %v597
        %v599 = vpop.f32.mrf.mxu0
        %v600 = vadd.f32 %v548, %v599
        %v601 = vand.u32 %v271, 4294901760
        %602 = vmatmul.f32.gmra.mxu0 %v601
        %v603 = vpop.f32.mrf.mxu0
        %v604 = vadd.f32 %v556, %v603
        %v605 = vand.u32 %v273, 4294901760
        %606 = vmatmul.f32.gmra.mxu0 %v605
        %v607 = vpop.f32.mrf.mxu0
        %v608 = vadd.f32 %v564, %v607
        %609 = vdwg.mxu0
        %610 = vmatpush.msra.mxu0 0.0
        %611 = vmatpush.msra.mxu0 0.0
        %612 = vmatpush.msra.mxu0 0.0
        %613 = vmatpush.msra.mxu0 0.0
        %614 = vmatpush.msra.mxu0 0.0
        %615 = vmatpush.msra.mxu0 0.0
        %616 = vmatpush.msra.mxu0 0.0
        %617 = vmatpush.msra.mxu0 0.0
        %618 = vmatpush.msra.mxu0 0.0
        %619 = vmatpush.msra.mxu0 0.0
        %620 = vmatpush.msra.mxu0 0.0
        %621 = vmatpush.msra.mxu0 0.0
        %622 = vmatpush.msra.mxu0 0.0
        %v623 = vand.u32 %v280, 4294901760
        %v624 = vsub.f32 %v280, %v623
        %625 = vmatpush.msra.mxu0 %v624
        %v626 = vand.u32 %v249, 4294901760
        %v627 = vsub.f32 %v249, %v626
        %628 = vmatpush.msra.mxu0 %v627
        %v629 = vand.u32 %v245, 4294901760
        %v630 = vsub.f32 %v245, %v629
        %631 = vmatpush.msra.mxu0 %v630
        %v632 = vand.u32 %v269, 4294901760
        %v633 = vsub.f32 %v269, %v632
        %634 = vmatmul.f32.gmra.mxu0 %v633
        %v635 = vpop.f32.mrf.mxu0
        %v636 = vadd.f32 %v600, %v635
        %v637 = vand.u32 %v271, 4294901760
        %v638 = vsub.f32 %v271, %v637
        %639 = vmatmul.f32.gmra.mxu0 %v638
        %v640 = vpop.f32.mrf.mxu0
        %v641 = vadd.f32 %v604, %v640
        %v642 = vand.u32 %v273, 4294901760
        %v643 = vsub.f32 %v273, %v642
        %644 = vmatmul.f32.gmra.mxu0 %v643
        %v645 = vpop.f32.mrf.mxu0
        %v646 = vadd.f32 %v608, %v645
        %647 = vdwg.mxu0
        %648 = vmatpush.msra.mxu0 0.0
        %649 = vmatpush.msra.mxu0 0.0
        %650 = vmatpush.msra.mxu0 0.0
        %651 = vmatpush.msra.mxu0 0.0
        %652 = vmatpush.msra.mxu0 0.0
        %653 = vmatpush.msra.mxu0 0.0
        %654 = vmatpush.msra.mxu0 0.0
        %655 = vmatpush.msra.mxu0 0.0
        %656 = vmatpush.msra.mxu0 0.0
        %657 = vmatpush.msra.mxu0 0.0
        %658 = vmatpush.msra.mxu0 0.0
        %659 = vmatpush.msra.mxu0 0.0
        %660 = vmatpush.msra.mxu0 0.0
        %v661 = vand.u32 %v280, 4294901760
        %662 = vmatpush.msra.mxu0 %v661
        %v663 = vand.u32 %v249, 4294901760
        %664 = vmatpush.msra.mxu0 %v663
        %v665 = vand.u32 %v245, 4294901760
        %666 = vmatpush.msra.mxu0 %v665
        %v667 = vand.u32 %v269, 4294901760
        %v668 = vsub.f32 %v269, %v667
        %v669 = vand.u32 %v668, 4294901760
        %670 = vmatmul.f32.gmra.mxu0 %v669
        %v671 = vpop.f32.mrf.mxu0
        %v672 = vadd.f32 %v636, %v671
        %v673 = vand.u32 %v271, 4294901760
        %v674 = vsub.f32 %v271, %v673
        %v675 = vand.u32 %v674, 4294901760
        %676 = vmatmul.f32.gmra.mxu0 %v675
        %v677 = vpop.f32.mrf.mxu0
        %v678 = vadd.f32 %v641, %v677
        %v679 = vand.u32 %v273, 4294901760
        %v680 = vsub.f32 %v273, %v679
        %v681 = vand.u32 %v680, 4294901760
        %682 = vmatmul.f32.gmra.mxu0 %v681
        %v683 = vpop.f32.mrf.mxu0
        %v684 = vadd.f32 %v646, %v683
        %685 = vdwg.mxu0
        %686 = vmatpush.msra.mxu0 0.0
        %687 = vmatpush.msra.mxu0 0.0
        %688 = vmatpush.msra.mxu0 0.0
        %689 = vmatpush.msra.mxu0 0.0
        %690 = vmatpush.msra.mxu0 0.0
        %691 = vmatpush.msra.mxu0 0.0
        %692 = vmatpush.msra.mxu0 0.0
        %693 = vmatpush.msra.mxu0 0.0
        %694 = vmatpush.msra.mxu0 0.0
        %695 = vmatpush.msra.mxu0 0.0
        %696 = vmatpush.msra.mxu0 0.0
        %697 = vmatpush.msra.mxu0 0.0
        %698 = vmatpush.msra.mxu0 0.0
        %v699 = vand.u32 %v280, 4294901760
        %v700 = vsub.f32 %v280, %v699
        %v701 = vand.u32 %v700, 4294901760
        %702 = vmatpush.msra.mxu0 %v701
        %v703 = vand.u32 %v249, 4294901760
        %v704 = vsub.f32 %v249, %v703
        %v705 = vand.u32 %v704, 4294901760
        %706 = vmatpush.msra.mxu0 %v705
        %v707 = vand.u32 %v245, 4294901760
        %v708 = vsub.f32 %v245, %v707
        %v709 = vand.u32 %v708, 4294901760
        %710 = vmatpush.msra.mxu0 %v709
        %v711 = vand.u32 %v269, 4294901760
        %712 = vmatmul.f32.gmra.mxu0 %v711
        %v713 = vpop.f32.mrf.mxu0
        %v714 = vadd.f32 %v672, %v713
        %v715 = vand.u32 %v271, 4294901760
        %716 = vmatmul.f32.gmra.mxu0 %v715
        %v717 = vpop.f32.mrf.mxu0
        %v718 = vadd.f32 %v678, %v717
        %v719 = vand.u32 %v273, 4294901760
        %720 = vmatmul.f32.gmra.mxu0 %v719
        %v721 = vpop.f32.mrf.mxu0
        %v722 = vadd.f32 %v684, %v721
        %723 = vdwg.mxu0
        %724 = vmatpush.msra.mxu0 0.0
        %725 = vmatpush.msra.mxu0 0.0
        %726 = vmatpush.msra.mxu0 0.0
        %727 = vmatpush.msra.mxu0 0.0
        %728 = vmatpush.msra.mxu0 0.0
        %729 = vmatpush.msra.mxu0 0.0
        %730 = vmatpush.msra.mxu0 0.0
        %731 = vmatpush.msra.mxu0 0.0
        %732 = vmatpush.msra.mxu0 0.0
        %733 = vmatpush.msra.mxu0 0.0
        %734 = vmatpush.msra.mxu0 0.0
        %735 = vmatpush.msra.mxu0 0.0
        %736 = vmatpush.msra.mxu0 0.0
        %v737 = vand.u32 %v280, 4294901760
        %738 = vmatpush.msra.mxu0 %v737
        %v739 = vand.u32 %v249, 4294901760
        %740 = vmatpush.msra.mxu0 %v739
        %v741 = vand.u32 %v245, 4294901760
        %742 = vmatpush.msra.mxu0 %v741
        %v743 = vand.u32 %v269, 4294901760
        %744 = vmatmul.f32.gmra.mxu0 %v743
        %v745 = vpop.f32.mrf.mxu0
        %v746 = vadd.f32 %v714, %v745
        %v747 = vand.u32 %v271, 4294901760
        %748 = vmatmul.f32.gmra.mxu0 %v747
        %v749 = vpop.f32.mrf.mxu0
        %v750 = vadd.f32 %v718, %v749
        %v751 = vand.u32 %v273, 4294901760
        %752 = vmatmul.f32.gmra.mxu0 %v751
        %v753 = vpop.f32.mrf.mxu0
        %v754 = vadd.f32 %v722, %v753
        %755 = vdwg.mxu0
        %756 = vmatpush.msra.mxu0 0.0
        %757 = vmatpush.msra.mxu0 0.0
        %758 = vmatpush.msra.mxu0 0.0
        %759 = vmatpush.msra.mxu0 0.0
        %760 = vmatpush.msra.mxu0 0.0
        %761 = vmatpush.msra.mxu0 0.0
        %762 = vmatpush.msra.mxu0 0.0
        %763 = vmatpush.msra.mxu0 0.0
        %764 = vmatpush.msra.mxu0 0.0
        %765 = vmatpush.msra.mxu0 0.0
        %766 = vmatpush.msra.mxu0 0.0
        %767 = vmatpush.msra.mxu0 0.0
        %768 = vmatpush.msra.mxu0 0.0
        %v769 = vand.u32 %v283, 4294901760
        %770 = vmatpush.msra.mxu0 %v769
        %v771 = vand.u32 %v250, 4294901760
        %772 = vmatpush.msra.mxu0 %v771
        %v773 = vand.u32 %v246, 4294901760
        %774 = vmatpush.msra.mxu0 %v773
        %v775 = vand.u32 %v269, 4294901760
        %v776 = vsub.f32 %v269, %v775
        %v777 = vand.u32 %v776, 4294901760
        %v778 = vsub.f32 %v776, %v777
        %v779 = vand.u32 %v778, 4294901760
        %780 = vmatmul.f32.gmra.mxu0 %v779
        %v781 = vpop.f32.mrf.mxu0
        %v782 = vadd.f32 %v258, %v781
        %v783 = vand.u32 %v271, 4294901760
        %v784 = vsub.f32 %v271, %v783
        %v785 = vand.u32 %v784, 4294901760
        %v786 = vsub.f32 %v784, %v785
        %v787 = vand.u32 %v786, 4294901760
        %788 = vmatmul.f32.gmra.mxu0 %v787
        %v789 = vpop.f32.mrf.mxu0
        %v790 = vadd.f32 %v262, %v789
        %v791 = vand.u32 %v273, 4294901760
        %v792 = vsub.f32 %v273, %v791
        %v793 = vand.u32 %v792, 4294901760
        %v794 = vsub.f32 %v792, %v793
        %v795 = vand.u32 %v794, 4294901760
        %796 = vmatmul.f32.gmra.mxu0 %v795
        %v797 = vpop.f32.mrf.mxu0
        %v798 = vadd.f32 %v266, %v797
        %799 = vdwg.mxu0
        %800 = vmatpush.msra.mxu0 0.0
        %801 = vmatpush.msra.mxu0 0.0
        %802 = vmatpush.msra.mxu0 0.0
        %803 = vmatpush.msra.mxu0 0.0
        %804 = vmatpush.msra.mxu0 0.0
        %805 = vmatpush.msra.mxu0 0.0
        %806 = vmatpush.msra.mxu0 0.0
        %807 = vmatpush.msra.mxu0 0.0
        %808 = vmatpush.msra.mxu0 0.0
        %809 = vmatpush.msra.mxu0 0.0
        %810 = vmatpush.msra.mxu0 0.0
        %811 = vmatpush.msra.mxu0 0.0
        %812 = vmatpush.msra.mxu0 0.0
        %v813 = vand.u32 %v283, 4294901760
        %v814 = vsub.f32 %v283, %v813
        %v815 = vand.u32 %v814, 4294901760
        %v816 = vsub.f32 %v814, %v815
        %v817 = vand.u32 %v816, 4294901760
        %818 = vmatpush.msra.mxu0 %v817
        %v819 = vand.u32 %v250, 4294901760
        %v820 = vsub.f32 %v250, %v819
        %v821 = vand.u32 %v820, 4294901760
        %v822 = vsub.f32 %v820, %v821
        %v823 = vand.u32 %v822, 4294901760
        %824 = vmatpush.msra.mxu0 %v823
        %v825 = vand.u32 %v246, 4294901760
        %v826 = vsub.f32 %v246, %v825
        %v827 = vand.u32 %v826, 4294901760
        %v828 = vsub.f32 %v826, %v827
        %v829 = vand.u32 %v828, 4294901760
        %830 = vmatpush.msra.mxu0 %v829
        %v831 = vand.u32 %v269, 4294901760
        %832 = vmatmul.f32.gmra.mxu0 %v831
        %v833 = vpop.f32.mrf.mxu0
        %v834 = vadd.f32 %v782, %v833
        %v835 = vand.u32 %v271, 4294901760
        %836 = vmatmul.f32.gmra.mxu0 %v835
        %v837 = vpop.f32.mrf.mxu0
        %v838 = vadd.f32 %v790, %v837
        %v839 = vand.u32 %v273, 4294901760
        %840 = vmatmul.f32.gmra.mxu0 %v839
        %v841 = vpop.f32.mrf.mxu0
        %v842 = vadd.f32 %v798, %v841
        %843 = vdwg.mxu0
        %844 = vmatpush.msra.mxu0 0.0
        %845 = vmatpush.msra.mxu0 0.0
        %846 = vmatpush.msra.mxu0 0.0
        %847 = vmatpush.msra.mxu0 0.0
        %848 = vmatpush.msra.mxu0 0.0
        %849 = vmatpush.msra.mxu0 0.0
        %850 = vmatpush.msra.mxu0 0.0
        %851 = vmatpush.msra.mxu0 0.0
        %852 = vmatpush.msra.mxu0 0.0
        %853 = vmatpush.msra.mxu0 0.0
        %854 = vmatpush.msra.mxu0 0.0
        %855 = vmatpush.msra.mxu0 0.0
        %856 = vmatpush.msra.mxu0 0.0
        %v857 = vand.u32 %v283, 4294901760
        %v858 = vsub.f32 %v283, %v857
        %859 = vmatpush.msra.mxu0 %v858
        %v860 = vand.u32 %v250, 4294901760
        %v861 = vsub.f32 %v250, %v860
        %862 = vmatpush.msra.mxu0 %v861
        %v863 = vand.u32 %v246, 4294901760
        %v864 = vsub.f32 %v246, %v863
        %865 = vmatpush.msra.mxu0 %v864
        %v866 = vand.u32 %v269, 4294901760
        %v867 = vsub.f32 %v269, %v866
        %868 = vmatmul.f32.gmra.mxu0 %v867
        %v869 = vpop.f32.mrf.mxu0
        %v870 = vadd.f32 %v834, %v869
        %v871 = vand.u32 %v271, 4294901760
        %v872 = vsub.f32 %v271, %v871
        %873 = vmatmul.f32.gmra.mxu0 %v872
        %v874 = vpop.f32.mrf.mxu0
        %v875 = vadd.f32 %v838, %v874
        %v876 = vand.u32 %v273, 4294901760
        %v877 = vsub.f32 %v273, %v876
        %878 = vmatmul.f32.gmra.mxu0 %v877
        %v879 = vpop.f32.mrf.mxu0
        %v880 = vadd.f32 %v842, %v879
        %881 = vdwg.mxu0
        %882 = vmatpush.msra.mxu0 0.0
        %883 = vmatpush.msra.mxu0 0.0
        %884 = vmatpush.msra.mxu0 0.0
        %885 = vmatpush.msra.mxu0 0.0
        %886 = vmatpush.msra.mxu0 0.0
        %887 = vmatpush.msra.mxu0 0.0
        %888 = vmatpush.msra.mxu0 0.0
        %889 = vmatpush.msra.mxu0 0.0
        %890 = vmatpush.msra.mxu0 0.0
        %891 = vmatpush.msra.mxu0 0.0
        %892 = vmatpush.msra.mxu0 0.0
        %893 = vmatpush.msra.mxu0 0.0
        %894 = vmatpush.msra.mxu0 0.0
        %v895 = vand.u32 %v283, 4294901760
        %896 = vmatpush.msra.mxu0 %v895
        %v897 = vand.u32 %v250, 4294901760
        %898 = vmatpush.msra.mxu0 %v897
        %v899 = vand.u32 %v246, 4294901760
        %900 = vmatpush.msra.mxu0 %v899
        %v901 = vand.u32 %v269, 4294901760
        %v902 = vsub.f32 %v269, %v901
        %v903 = vand.u32 %v902, 4294901760
        %904 = vmatmul.f32.gmra.mxu0 %v903
        %v905 = vpop.f32.mrf.mxu0
        %v906 = vadd.f32 %v870, %v905
        %v907 = vand.u32 %v271, 4294901760
        %v908 = vsub.f32 %v271, %v907
        %v909 = vand.u32 %v908, 4294901760
        %910 = vmatmul.f32.gmra.mxu0 %v909
        %v911 = vpop.f32.mrf.mxu0
        %v912 = vadd.f32 %v875, %v911
        %v913 = vand.u32 %v273, 4294901760
        %v914 = vsub.f32 %v273, %v913
        %v915 = vand.u32 %v914, 4294901760
        %916 = vmatmul.f32.gmra.mxu0 %v915
        %v917 = vpop.f32.mrf.mxu0
        %v918 = vadd.f32 %v880, %v917
        %919 = vdwg.mxu0
        %920 = vmatpush.msra.mxu0 0.0
        %921 = vmatpush.msra.mxu0 0.0
        %922 = vmatpush.msra.mxu0 0.0
        %923 = vmatpush.msra.mxu0 0.0
        %924 = vmatpush.msra.mxu0 0.0
        %925 = vmatpush.msra.mxu0 0.0
        %926 = vmatpush.msra.mxu0 0.0
        %927 = vmatpush.msra.mxu0 0.0
        %928 = vmatpush.msra.mxu0 0.0
        %929 = vmatpush.msra.mxu0 0.0
        %930 = vmatpush.msra.mxu0 0.0
        %931 = vmatpush.msra.mxu0 0.0
        %932 = vmatpush.msra.mxu0 0.0
        %v933 = vand.u32 %v283, 4294901760
        %v934 = vsub.f32 %v283, %v933
        %v935 = vand.u32 %v934, 4294901760
        %936 = vmatpush.msra.mxu0 %v935
        %v937 = vand.u32 %v250, 4294901760
        %v938 = vsub.f32 %v250, %v937
        %v939 = vand.u32 %v938, 4294901760
        %940 = vmatpush.msra.mxu0 %v939
        %v941 = vand.u32 %v246, 4294901760
        %v942 = vsub.f32 %v246, %v941
        %v943 = vand.u32 %v942, 4294901760
        %944 = vmatpush.msra.mxu0 %v943
        %v945 = vand.u32 %v269, 4294901760
        %946 = vmatmul.f32.gmra.mxu0 %v945
        %v947 = vpop.f32.mrf.mxu0
        %v948 = vadd.f32 %v906, %v947
        %v949 = vand.u32 %v271, 4294901760
        %950 = vmatmul.f32.gmra.mxu0 %v949
        %v951 = vpop.f32.mrf.mxu0
        %v952 = vadd.f32 %v912, %v951
        %v953 = vand.u32 %v273, 4294901760
        %954 = vmatmul.f32.gmra.mxu0 %v953
        %v955 = vpop.f32.mrf.mxu0
        %v956 = vadd.f32 %v918, %v955
        %957 = vdwg.mxu0
        %958 = vmatpush.msra.mxu0 0.0
        %959 = vmatpush.msra.mxu0 0.0
        %960 = vmatpush.msra.mxu0 0.0
        %961 = vmatpush.msra.mxu0 0.0
        %962 = vmatpush.msra.mxu0 0.0
        %963 = vmatpush.msra.mxu0 0.0
        %964 = vmatpush.msra.mxu0 0.0
        %965 = vmatpush.msra.mxu0 0.0
        %966 = vmatpush.msra.mxu0 0.0
        %967 = vmatpush.msra.mxu0 0.0
        %968 = vmatpush.msra.mxu0 0.0
        %969 = vmatpush.msra.mxu0 0.0
        %970 = vmatpush.msra.mxu0 0.0
        %v971 = vand.u32 %v283, 4294901760
        %972 = vmatpush.msra.mxu0 %v971
        %v973 = vand.u32 %v250, 4294901760
        %974 = vmatpush.msra.mxu0 %v973
        %v975 = vand.u32 %v246, 4294901760
        %976 = vmatpush.msra.mxu0 %v975
        %v977 = vand.u32 %v269, 4294901760
        %978 = vmatmul.f32.gmra.mxu0 %v977
        %v979 = vpop.f32.mrf.mxu0
        %v980 = vadd.f32 %v948, %v979
        %v981 = vand.u32 %v271, 4294901760
        %982 = vmatmul.f32.gmra.mxu0 %v981
        %v983 = vpop.f32.mrf.mxu0
        %v984 = vadd.f32 %v952, %v983
        %v985 = vand.u32 %v273, 4294901760
        %986 = vmatmul.f32.gmra.mxu0 %v985
        %v987 = vpop.f32.mrf.mxu0
        %v988 = vadd.f32 %v956, %v987
        %989 = vdwg.mxu0
        %990 = vmatpush.msra.mxu0 0.0
        %991 = vmatpush.msra.mxu0 0.0
        %992 = vmatpush.msra.mxu0 0.0
        %993 = vmatpush.msra.mxu0 0.0
        %994 = vmatpush.msra.mxu0 0.0
        %995 = vmatpush.msra.mxu0 0.0
        %996 = vmatpush.msra.mxu0 0.0
        %997 = vmatpush.msra.mxu0 0.0
        %998 = vmatpush.msra.mxu0 0.0
        %999 = vmatpush.msra.mxu0 0.0
        %1000 = vmatpush.msra.mxu0 0.0
        %1001 = vmatpush.msra.mxu0 0.0
        %1002 = vmatpush.msra.mxu0 0.0
        %v1003 = vand.u32 %v286, 4294901760
        %1004 = vmatpush.msra.mxu0 %v1003
        %v1005 = vand.u32 %v251, 4294901760
        %1006 = vmatpush.msra.mxu0 %v1005
        %v1007 = vand.u32 %v247, 4294901760
        %1008 = vmatpush.msra.mxu0 %v1007
        %v1009 = vand.u32 %v269, 4294901760
        %v1010 = vsub.f32 %v269, %v1009
        %v1011 = vand.u32 %v1010, 4294901760
        %v1012 = vsub.f32 %v1010, %v1011
        %v1013 = vand.u32 %v1012, 4294901760
        %1014 = vmatmul.f32.gmra.mxu0 %v1013
        %v1015 = vpop.f32.mrf.mxu0
        %v1016 = vadd.f32 %v258, %v1015
        %v1017 = vand.u32 %v271, 4294901760
        %v1018 = vsub.f32 %v271, %v1017
        %v1019 = vand.u32 %v1018, 4294901760
        %v1020 = vsub.f32 %v1018, %v1019
        %v1021 = vand.u32 %v1020, 4294901760
        %1022 = vmatmul.f32.gmra.mxu0 %v1021
        %v1023 = vpop.f32.mrf.mxu0
        %v1024 = vadd.f32 %v262, %v1023
        %v1025 = vand.u32 %v273, 4294901760
        %v1026 = vsub.f32 %v273, %v1025
        %v1027 = vand.u32 %v1026, 4294901760
        %v1028 = vsub.f32 %v1026, %v1027
        %v1029 = vand.u32 %v1028, 4294901760
        %1030 = vmatmul.f32.gmra.mxu0 %v1029
        %v1031 = vpop.f32.mrf.mxu0
        %v1032 = vadd.f32 %v266, %v1031
        %1033 = vdwg.mxu0
        %1034 = vmatpush.msra.mxu0 0.0
        %1035 = vmatpush.msra.mxu0 0.0
        %1036 = vmatpush.msra.mxu0 0.0
        %1037 = vmatpush.msra.mxu0 0.0
        %1038 = vmatpush.msra.mxu0 0.0
        %1039 = vmatpush.msra.mxu0 0.0
        %1040 = vmatpush.msra.mxu0 0.0
        %1041 = vmatpush.msra.mxu0 0.0
        %1042 = vmatpush.msra.mxu0 0.0
        %1043 = vmatpush.msra.mxu0 0.0
        %1044 = vmatpush.msra.mxu0 0.0
        %1045 = vmatpush.msra.mxu0 0.0
        %1046 = vmatpush.msra.mxu0 0.0
        %v1047 = vand.u32 %v286, 4294901760
        %v1048 = vsub.f32 %v286, %v1047
        %v1049 = vand.u32 %v1048, 4294901760
        %v1050 = vsub.f32 %v1048, %v1049
        %v1051 = vand.u32 %v1050, 4294901760
        %1052 = vmatpush.msra.mxu0 %v1051
        %v1053 = vand.u32 %v251, 4294901760
        %v1054 = vsub.f32 %v251, %v1053
        %v1055 = vand.u32 %v1054, 4294901760
        %v1056 = vsub.f32 %v1054, %v1055
        %v1057 = vand.u32 %v1056, 4294901760
        %1058 = vmatpush.msra.mxu0 %v1057
        %v1059 = vand.u32 %v247, 4294901760
        %v1060 = vsub.f32 %v247, %v1059
        %v1061 = vand.u32 %v1060, 4294901760
        %v1062 = vsub.f32 %v1060, %v1061
        %v1063 = vand.u32 %v1062, 4294901760
        %1064 = vmatpush.msra.mxu0 %v1063
        %v1065 = vand.u32 %v269, 4294901760
        %1066 = vmatmul.f32.gmra.mxu0 %v1065
        %v1067 = vpop.f32.mrf.mxu0
        %v1068 = vadd.f32 %v1016, %v1067
        %v1069 = vand.u32 %v271, 4294901760
        %1070 = vmatmul.f32.gmra.mxu0 %v1069
        %v1071 = vpop.f32.mrf.mxu0
        %v1072 = vadd.f32 %v1024, %v1071
        %v1073 = vand.u32 %v273, 4294901760
        %1074 = vmatmul.f32.gmra.mxu0 %v1073
        %v1075 = vpop.f32.mrf.mxu0
        %v1076 = vadd.f32 %v1032, %v1075
        %1077 = vdwg.mxu0
        %1078 = vmatpush.msra.mxu0 0.0
        %1079 = vmatpush.msra.mxu0 0.0
        %1080 = vmatpush.msra.mxu0 0.0
        %1081 = vmatpush.msra.mxu0 0.0
        %1082 = vmatpush.msra.mxu0 0.0
        %1083 = vmatpush.msra.mxu0 0.0
        %1084 = vmatpush.msra.mxu0 0.0
        %1085 = vmatpush.msra.mxu0 0.0
        %1086 = vmatpush.msra.mxu0 0.0
        %1087 = vmatpush.msra.mxu0 0.0
        %1088 = vmatpush.msra.mxu0 0.0
        %1089 = vmatpush.msra.mxu0 0.0
        %1090 = vmatpush.msra.mxu0 0.0
        %v1091 = vand.u32 %v286, 4294901760
        %v1092 = vsub.f32 %v286, %v1091
        %1093 = vmatpush.msra.mxu0 %v1092
        %v1094 = vand.u32 %v251, 4294901760
        %v1095 = vsub.f32 %v251, %v1094
        %1096 = vmatpush.msra.mxu0 %v1095
        %v1097 = vand.u32 %v247, 4294901760
        %v1098 = vsub.f32 %v247, %v1097
        %1099 = vmatpush.msra.mxu0 %v1098
        %v1100 = vand.u32 %v269, 4294901760
        %v1101 = vsub.f32 %v269, %v1100
        %1102 = vmatmul.f32.gmra.mxu0 %v1101
        %v1103 = vpop.f32.mrf.mxu0
        %v1104 = vadd.f32 %v1068, %v1103
        %v1105 = vand.u32 %v271, 4294901760
        %v1106 = vsub.f32 %v271, %v1105
        %1107 = vmatmul.f32.gmra.mxu0 %v1106
        %v1108 = vpop.f32.mrf.mxu0
        %v1109 = vadd.f32 %v1072, %v1108
        %v1110 = vand.u32 %v273, 4294901760
        %v1111 = vsub.f32 %v273, %v1110
        %1112 = vmatmul.f32.gmra.mxu0 %v1111
        %v1113 = vpop.f32.mrf.mxu0
        %v1114 = vadd.f32 %v1076, %v1113
        %1115 = vdwg.mxu0
        %1116 = vmatpush.msra.mxu0 0.0
        %1117 = vmatpush.msra.mxu0 0.0
        %1118 = vmatpush.msra.mxu0 0.0
        %1119 = vmatpush.msra.mxu0 0.0
        %1120 = vmatpush.msra.mxu0 0.0
        %1121 = vmatpush.msra.mxu0 0.0
        %1122 = vmatpush.msra.mxu0 0.0
        %1123 = vmatpush.msra.mxu0 0.0
        %1124 = vmatpush.msra.mxu0 0.0
        %1125 = vmatpush.msra.mxu0 0.0
        %1126 = vmatpush.msra.mxu0 0.0
        %1127 = vmatpush.msra.mxu0 0.0
        %1128 = vmatpush.msra.mxu0 0.0
        %v1129 = vand.u32 %v286, 4294901760
        %1130 = vmatpush.msra.mxu0 %v1129
        %v1131 = vand.u32 %v251, 4294901760
        %1132 = vmatpush.msra.mxu0 %v1131
        %v1133 = vand.u32 %v247, 4294901760
        %1134 = vmatpush.msra.mxu0 %v1133
        %v1135 = vand.u32 %v269, 4294901760
        %v1136 = vsub.f32 %v269, %v1135
        %v1137 = vand.u32 %v1136, 4294901760
        %1138 = vmatmul.f32.gmra.mxu0 %v1137
        %v1139 = vpop.f32.mrf.mxu0
        %v1140 = vadd.f32 %v1104, %v1139
        %v1141 = vand.u32 %v271, 4294901760
        %v1142 = vsub.f32 %v271, %v1141
        %v1143 = vand.u32 %v1142, 4294901760
        %1144 = vmatmul.f32.gmra.mxu0 %v1143
        %v1145 = vpop.f32.mrf.mxu0
        %v1146 = vadd.f32 %v1109, %v1145
        %v1147 = vand.u32 %v273, 4294901760
        %v1148 = vsub.f32 %v273, %v1147
        %v1149 = vand.u32 %v1148, 4294901760
        %1150 = vmatmul.f32.gmra.mxu0 %v1149
        %v1151 = vpop.f32.mrf.mxu0
        %v1152 = vadd.f32 %v1114, %v1151
        %1153 = vdwg.mxu0
        %1154 = vmatpush.msra.mxu0 0.0
        %1155 = vmatpush.msra.mxu0 0.0
        %1156 = vmatpush.msra.mxu0 0.0
        %1157 = vmatpush.msra.mxu0 0.0
        %1158 = vmatpush.msra.mxu0 0.0
        %1159 = vmatpush.msra.mxu0 0.0
        %1160 = vmatpush.msra.mxu0 0.0
        %1161 = vmatpush.msra.mxu0 0.0
        %1162 = vmatpush.msra.mxu0 0.0
        %1163 = vmatpush.msra.mxu0 0.0
        %1164 = vmatpush.msra.mxu0 0.0
        %1165 = vmatpush.msra.mxu0 0.0
        %1166 = vmatpush.msra.mxu0 0.0
        %v1167 = vand.u32 %v286, 4294901760
        %v1168 = vsub.f32 %v286, %v1167
        %v1169 = vand.u32 %v1168, 4294901760
        %1170 = vmatpush.msra.mxu0 %v1169
        %v1171 = vand.u32 %v251, 4294901760
        %v1172 = vsub.f32 %v251, %v1171
        %v1173 = vand.u32 %v1172, 4294901760
        %1174 = vmatpush.msra.mxu0 %v1173
        %v1175 = vand.u32 %v247, 4294901760
        %v1176 = vsub.f32 %v247, %v1175
        %v1177 = vand.u32 %v1176, 4294901760
        %1178 = vmatpush.msra.mxu0 %v1177
        %v1179 = vand.u32 %v269, 4294901760
        %1180 = vmatmul.f32.gmra.mxu0 %v1179
        %v1181 = vpop.f32.mrf.mxu0
        %v1182 = vadd.f32 %v1140, %v1181
        %v1183 = vand.u32 %v271, 4294901760
        %1184 = vmatmul.f32.gmra.mxu0 %v1183
        %v1185 = vpop.f32.mrf.mxu0
        %v1186 = vadd.f32 %v1146, %v1185
        %v1187 = vand.u32 %v273, 4294901760
        %1188 = vmatmul.f32.gmra.mxu0 %v1187
        %v1189 = vpop.f32.mrf.mxu0
        %v1190 = vadd.f32 %v1152, %v1189
        %1191 = vdwg.mxu0
        %1192 = vmatpush.msra.mxu0 0.0
        %1193 = vmatpush.msra.mxu0 0.0
        %1194 = vmatpush.msra.mxu0 0.0
        %1195 = vmatpush.msra.mxu0 0.0
        %1196 = vmatpush.msra.mxu0 0.0
        %1197 = vmatpush.msra.mxu0 0.0
        %1198 = vmatpush.msra.mxu0 0.0
        %1199 = vmatpush.msra.mxu0 0.0
        %1200 = vmatpush.msra.mxu0 0.0
        %1201 = vmatpush.msra.mxu0 0.0
        %1202 = vmatpush.msra.mxu0 0.0
        %1203 = vmatpush.msra.mxu0 0.0
        %1204 = vmatpush.msra.mxu0 0.0
        %v1205 = vand.u32 %v286, 4294901760
        %1206 = vmatpush.msra.mxu0 %v1205
        %v1207 = vand.u32 %v251, 4294901760
        %1208 = vmatpush.msra.mxu0 %v1207
        %v1209 = vand.u32 %v247, 4294901760
        %1210 = vmatpush.msra.mxu0 %v1209
        %v1211 = vand.u32 %v269, 4294901760
        %1212 = vmatmul.f32.gmra.mxu0 %v1211
        %v1213 = vpop.f32.mrf.mxu0
        %v1214 = vadd.f32 %v1182, %v1213
        %v1215 = vand.u32 %v271, 4294901760
        %1216 = vmatmul.f32.gmra.mxu0 %v1215
        %v1217 = vpop.f32.mrf.mxu0
        %v1218 = vadd.f32 %v1186, %v1217
        %v1219 = vand.u32 %v273, 4294901760
        %1220 = vmatmul.f32.gmra.mxu0 %v1219
        %v1221 = vpop.f32.mrf.mxu0
        %v1222 = vadd.f32 %v1190, %v1221
        %1223 = vdwg.mxu0
        %v1224 = vtanh.pop %v512
        %v1225 = vtanh.pop %v746
        %v1226 = vtanh.pop %v980
        %v1227 = vtanh.pop %v1214
        %v1228 = vtanh.pop %v516
        %v1229 = vtanh.pop %v750
        %v1230 = vtanh.pop %v984
        %v1231 = vtanh.pop %v1218
        %v1232 = vtanh.pop %v520
        %v1233 = vtanh.pop %v754
        %v1234 = vtanh.pop %v988
        %v1235 = vtanh.pop %v1222
        %1236 = vset.pattern.permute.xlu0 23
        %1237 = vperm.xlu0 %1236, %v181
        %v1238 = vpop.permute.xlu0 %1237
        %1240 = vset.pattern.permute.xlu0 23
        %1241 = vperm.xlu0 %1240, %v182
        %v1242 = vpop.permute.xlu0 %1241
        %1244 = vset.pattern.permute.xlu0 23
        %1245 = vperm.xlu0 %1244, %v183
        %v1246 = vpop.permute.xlu0 %1245
        %v1248 = vmul.f32 %v1238, %v1224
        %v1249 = vmul.f32 %v1238, %v1225
        %v1250 = vmul.f32 %v1238, %v1226
        %v1251 = vmul.f32 %v1238, %v1227
        %v1252 = vmul.f32 %v1242, %v1228
        %v1253 = vmul.f32 %v1242, %v1229
        %v1254 = vmul.f32 %v1242, %v1230
        %v1255 = vmul.f32 %v1242, %v1231
        %v1256 = vmul.f32 %v1246, %v1232
        %v1257 = vmul.f32 %v1246, %v1233
        %v1258 = vmul.f32 %v1246, %v1234
        %v1259 = vmul.f32 %v1246, %v1235
        %v1260 = vadd.f32 %v1248, %v1252
        %v1261 = vsel %vm275, %v1256, 0.0
        %v1262 = vadd.f32 %v1260, %v1261
        %v1263 = vrot.slane %v1262, 4
        %v1264 = vadd.f32 %v1262, %v1263
        %v1265 = vrot.slane %v1264, 2
        %v1266 = vadd.f32 %v1264, %v1265
        %v1267 = vrot.slane %v1266, 1
        %v1268 = vadd.f32 %v1266, %v1267
        %v1269 = vadd.f32 %v1249, %v1253
        %v1270 = vsel %vm275, %v1257, 0.0
        %v1271 = vadd.f32 %v1269, %v1270
        %v1272 = vrot.slane %v1271, 4
        %v1273 = vadd.f32 %v1271, %v1272
        %v1274 = vrot.slane %v1273, 2
        %v1275 = vadd.f32 %v1273, %v1274
        %v1276 = vrot.slane %v1275, 1
        %v1277 = vadd.f32 %v1275, %v1276
        %v1278 = vadd.f32 %v1250, %v1254
        %v1279 = vsel %vm275, %v1258, 0.0
        %v1280 = vadd.f32 %v1278, %v1279
        %v1281 = vrot.slane %v1280, 4
        %v1282 = vadd.f32 %v1280, %v1281
        %v1283 = vrot.slane %v1282, 2
        %v1284 = vadd.f32 %v1282, %v1283
        %v1285 = vrot.slane %v1284, 1
        %v1286 = vadd.f32 %v1284, %v1285
        %v1287 = vadd.f32 %v1251, %v1255
        %v1288 = vsel %vm275, %v1259, 0.0
        %v1289 = vadd.f32 %v1287, %v1288
        %v1290 = vrot.slane %v1289, 4
        %v1291 = vadd.f32 %v1289, %v1290
        %v1292 = vrot.slane %v1291, 2
        %v1293 = vadd.f32 %v1291, %v1292
        %v1294 = vrot.slane %v1293, 1
        %v1295 = vadd.f32 %v1293, %v1294
        %1296 = vset.pattern.permute.xlu0 24
        %1297 = vperm.xlu0 %1296, %v181
        %v1298 = vpop.permute.xlu0 %1297
        %v1300 = vadd.f32 %v1268, %v1298
        %v1301 = vadd.f32 %v1277, %v1298
        %v1302 = vadd.f32 %v1286, %v1298
        %v1303 = vadd.f32 %v1295, %v1298
        %v1308 = vrot.slane %v1301, 7
        %v1309 = vrot.slane %v1302, 6
        %v1310 = vrot.slane %v1303, 5
        %vm1311 = vcmask 1040384
        %v1312 = vsel %vm1311, %v1300, %v1308
        %vm1313 = vcmask 1042434
        %v1314 = vsel %vm1313, %v1309, %v1310
        %vm1315 = vcmask 1041408
        %v1316 = vsel %vm1315, %v1312, %v1314
        %v1318 = vlaneseq
        %vm1319 = vcmp.ge.s32.totalorder %v1318, 0
        %vm1320 = vcmp.lt.s32.totalorder %v1318, 512
        %vm1321 = vmand %vm1319, %vm1320
        %1322 = vst.msk [vmem:[%s177] sm:$0xf] %vm1321, %v1316
        %s1323 = sand.u32 %s75, 1
        %s1324 = scalar_lea.sflag [#allocation4], %s1323
        %s1325 = sand.u32 %s75, 1
        %s1326 = smul.addr %s1325, 4
        %s1327 = scalar_lea.vmem [#allocation7], %s1326
        // Predicated region
        $region37: #{tpu_custom_call.1} parent=27 // pred_check
          %p1328 = pneg %p85
        $region38: #{tpu_custom_call.1} parent=27 // pred_check_branch
          %1330 = sbr.rel (%p1328) target = $region40
        $region39: #{tpu_custom_call.1} parent=27 // pred_region
          %s1331 = smul.u32 4, %s20
          %1333 = vsyncadd %s1324, 0
          %s1334 = scalar_lea.hbm %s2, %s1331
          %s1336 = sshll.u32 %s1327, 4
          %s1337 = int_to_ptr.vmem [resolvable:$true] %s1336
          %s1338 = sshll.u32 %s1334, 4
          %s1339 = int_to_ptr.hbm [resolvable:$true] %s1338
          %1341 = dma.vmem_to_hbm [thread:$0]  %s1337, 64, %s1339, %s1324
        $region40: #{tpu_custom_call.1} parent=27 // pred_fallthru
          _
      $region28: #{tpu_custom_call.1} parent=5 // pred_fallthru
        _
      %p1342 = scmp.le.s32.totalorder 2, %s15
      // Predicated region
      $region41: #{tpu_custom_call.1} parent=5 // pred_check
        %p1343 = pneg %p1342
      $region42: #{tpu_custom_call.1} parent=5 // pred_check_branch
        %1345 = sbr.rel (%p1343) target = $region44
      $region43: #{tpu_custom_call.1} parent=5 // pred_region
        %s1346 = ssub.s32 %s15, 2
        // Predicated region
        $region45: #{tpu_custom_call.1} parent=43 // pred_check
          %p1347 = pneg %p91
        $region46: #{tpu_custom_call.1} parent=43 // pred_check_branch
          %1349 = sbr.rel (%p1347) target = $region48
        $region47: #{tpu_custom_call.1} parent=43 // pred_region
          %s1350 = sand.u32 %s76, 1
          %s1351 = scalar_lea.sflag [#allocation4], %s1350
          %s1352 = sand.u32 %s76, 1
          %s1353 = smul.addr %s1352, 4
          %s1354 = scalar_lea.vmem [#allocation7], %s1353
          %1356 = dma.done %s1351, 64
        $region48: #{tpu_custom_call.1} parent=43 // pred_fallthru
          _
      $region44: #{tpu_custom_call.1} parent=5 // pred_fallthru
        _
    $region6: #{tpu_custom_call.1} parent=1 // loop_footer
      %s19 = sadd.s32 1, %s15
    $region7: #{tpu_custom_call.1} parent=1 // loop_footer_branch
      %14 = sbr.rel target = $region3
    $region8: #{tpu_custom_call.1} parent=1 // loop_exit
      _
    %1357 = vsyncpa [#allocation3], 1
    %s1358 = scalar_lea.sflag [#allocation3], 1
    %1359 = vsyncpa %s1358, 1
    %1360 = vsyncpa [#allocation6], 1
    %1361 = vsyncpa [#allocation4], 1
    %s1362 = scalar_lea.sflag [#allocation4], 1
    %1363 = vsyncpa %s1362, 1

</llo_original>
